<compile_context>
chip_gen: v6e
topology: v6e:2x2x1
jax: 0.10.0
libtpu: 0.0.40
codegen_flags: <defaults>
</compile_context>

<pallas_src>
import jax
import jax.numpy as jnp
from jax.experimental import pallas as pl
from jax.experimental.pallas import tpu as pltpu

HIDDEN = 128        # hidden width of the MLP
LANE = 128          # lane-dense output width; real Q-values in lanes [0, output_dim)
MAX_TILE_B = 4096   # per-tile row cap (keeps per-step VMEM well under 16 MiB scoped)


def _round_up(n, m):
    return ((n + m - 1) // m) * m


def dqn_kernel(x_ref, w1_ref, b1_ref, w2_ref, b2_ref, w3_ref, b3_ref, o_ref):
    # First layer in f32 (tiny K=4 matmul; keeps input features unquantized).
    x = x_ref[...]                                                      # (tile_b, in_dim) f32
    h1 = jnp.dot(x, w1_ref[...], preferred_element_type=jnp.float32) + b1_ref[...]
    h1 = jnp.maximum(h1, 0.0)
    # Hidden / output layers: bf16 MXU operands, f32 accumulation.
    h2 = jnp.dot(h1.astype(jnp.bfloat16), w2_ref[...],
                 preferred_element_type=jnp.float32) + b2_ref[...]
    h2 = jnp.maximum(h2, 0.0)
    q = jnp.dot(h2.astype(jnp.bfloat16), w3_ref[...],
                preferred_element_type=jnp.float32) + b3_ref[...]
    # Lane-dense (tile_b, 128) unmasked bf16 store; lanes >= output_dim are zero
    # because w3/b3 are zero-padded.
    o_ref[...] = q.astype(o_ref.dtype)


def prepare_params(params, input_dim, output_dim):
    """Pad + cast the f32 [in, out]-layout params into kernel-friendly form."""
    w1, b1, w2, b2, w3, b3 = params
    del input_dim  # w1 stays (in_dim, 128) f32; no feature padding needed.
    w3p = (jnp.zeros((HIDDEN, LANE), jnp.float32)
           .at[:, :output_dim].set(w3).astype(jnp.bfloat16))            # (128, 128) bf16
    b3p = jnp.zeros((1, LANE), jnp.float32).at[:, :output_dim].set(b3)  # (1, 128) f32
    return (w1, b1, w2.astype(jnp.bfloat16), b2, w3p, b3p)


def _pick_tile_b(batch):
    """Batch-tile heuristic (see header): one tile up to 1024 rows, then an even
    number (>=2) of tiles of at most MAX_TILE_B rows each."""
    if batch <= 1024:
        return _round_up(max(batch, 1), 8)
    n_tiles = max(2, 2 * pl.cdiv(batch, 2 * MAX_TILE_B))   # even, >= 2 (v7x dual-TC)
    return _round_up(pl.cdiv(batch, n_tiles), 8)


def dqn_forward(x, kernel_params, output_dim, tile_b=None):
    """x: [batch, input_dim] f32 -> Q-values [batch, output_dim] f32."""
    w1, b1, w2, b2, w3, b3 = kernel_params
    batch, in_dim = x.shape

    if tile_b is None:
        tile_b = _pick_tile_b(batch)
    padded_batch = _round_up(batch, tile_b)

    # Only materialize a (row-)pad of x when the batch does not divide the tile.
    if padded_batch != batch:
        xin = jnp.zeros((padded_batch, in_dim), x.dtype).at[:batch].set(x)
    else:
        xin = x

    grid = (padded_batch // tile_b,)
    tile_map = lambda i: (i, 0)   # batch-tiled operands
    pinned = lambda i: (0, 0)     # grid-invariant -> weights/biases stay VMEM-resident

    # Advisory cost estimate so XLA can overlap this small call with other work.
    flops = 2 * padded_batch * (in_dim * HIDDEN + HIDDEN * HIDDEN + HIDDEN * LANE)
    param_bytes = sum(int(p.size) * p.dtype.itemsize for p in kernel_params)
    bytes_accessed = int(xin.size) * xin.dtype.itemsize + param_bytes \
        + padded_batch * LANE * 2  # bf16 output
    cost = pl.CostEstimate(flops=flops, transcendentals=0,
                           bytes_accessed=bytes_accessed)

    # Per-step VMEM estimate (~3.5 KiB/row: lane-inflated x block + double-buffered
    # bf16 output block + f32/bf16 intermediates) + ~1 MiB slack for pinned weights.
    compiler_kwargs = dict(dimension_semantics=("parallel",))
    vmem_est = tile_b * 3584 + (1 << 20)
    if vmem_est > 16 * 1024 * 1024:   # only needed for very large manual tiles
        compiler_kwargs["vmem_limit_bytes"] = int(min(vmem_est, 56 * 1024 * 1024))

    out = pl.pallas_call(
        dqn_kernel,
        out_shape=jax.ShapeDtypeStruct((padded_batch, LANE), jnp.bfloat16),
        grid=grid,
        in_specs=[
            pl.BlockSpec((tile_b, in_dim), tile_map),
            pl.BlockSpec(w1.shape, pinned),
            pl.BlockSpec(b1.shape, pinned),
            pl.BlockSpec(w2.shape, pinned),
            pl.BlockSpec(b2.shape, pinned),
            pl.BlockSpec(w3.shape, pinned),
            pl.BlockSpec(b3.shape, pinned),
        ],
        out_specs=pl.BlockSpec((tile_b, LANE), tile_map),
        compiler_params=pltpu.CompilerParams(**compiler_kwargs),
        cost_estimate=cost,
    )(xin, w1, b1, w2, b2, w3, b3)

    # Slice away batch padding + lane padding; cast the tiny Q block back to f32.
    return out[:batch, :output_dim].astype(jnp.float32)


def init_dqn_params(key, input_dim, output_dim, hidden=HIDDEN):
    """Mimics PyTorch nn.Linear default init: U(-1/sqrt(fan_in), +1/sqrt(fan_in))."""
    keys = jax.random.split(key, 6)

    def linear(kw, kb, fan_in, fan_out):
        bound = 1.0 / jnp.sqrt(jnp.float32(fan_in))
        w = jax.random.uniform(kw, (fan_in, fan_out), jnp.float32, -bound, bound)
        b = jax.random.uniform(kb, (1, fan_out), jnp.float32, -bound, bound)
        return w, b

    w1, b1 = linear(keys[0], keys[1], input_dim, hidden)
    w2, b2 = linear(keys[2], keys[3], hidden, hidden)
    w3, b3 = linear(keys[4], keys[5], hidden, output_dim)
    return (w1, b1, w2, b2, w3, b3)


def ref_forward_quantized(x, kernel_params, output_dim):
    """Plain-JAX reference with the same quantization choices as the kernel
    (f32 first layer, bf16 w2/w3, f32 accumulation, bf16 output)."""
    w1, b1, w2, b2, w3, b3 = kernel_params
    h1 = jnp.maximum(jnp.dot(x, w1, preferred_element_type=jnp.float32) + b1, 0.0)
    h2 = jnp.maximum(jnp.dot(h1.astype(jnp.bfloat16), w2,
                             preferred_element_type=jnp.float32) + b2, 0.0)
    q = jnp.dot(h2.astype(jnp.bfloat16), w3,
                preferred_element_type=jnp.float32) + b3
    return q[:, :output_dim].astype(jnp.bfloat16).astype(jnp.float32)


def ref_forward_f32(x, params_f32):
    w1, b1, w2, b2, w3, b3 = params_f32
    h = jnp.maximum(x @ w1 + b1, 0.0)
    h = jnp.maximum(h @ w2 + b2, 0.0)
    return h @ w3 + b3


if __name__ == "__main__":
    # CartPole-v1: observation dim = 4, action dim = 2
    input_dim, output_dim = 4, 2
    batch = 8

    key = jax.random.PRNGKey(0)
    k_x, k_x2, k_p = jax.random.split(key, 3)

    x = jax.random.normal(k_x, (batch, input_dim), jnp.float32)
    params_f32 = init_dqn_params(k_p, input_dim, output_dim)
    kernel_params = prepare_params(params_f32, input_dim, output_dim)

    # --- single-tile path (batch=8, grid=(1,)) ---
    q_values = dqn_forward(x, kernel_params, output_dim)
    q_values = jax.block_until_ready(q_values)
    assert q_values.shape == (batch, output_dim)
    assert q_values.dtype == jnp.float32

    ref_q = ref_forward_quantized(x, kernel_params, output_dim)
    assert jnp.allclose(q_values, ref_q, atol=2e-2, rtol=2e-2), \
        float(jnp.max(jnp.abs(q_values - ref_q)))

    ref_f32 = ref_forward_f32(x, params_f32)[:, :output_dim]
    assert jnp.allclose(q_values, ref_f32, atol=7e-2, rtol=7e-2)

    # --- multi-tile + batch-padding path (batch=20, tile_b=8 -> grid=(3,)) ---
    batch2 = 20
    x2 = jax.random.normal(k_x2, (batch2, input_dim), jnp.float32)
    q2 = jax.block_until_ready(dqn_forward(x2, kernel_params, output_dim, tile_b=8))
    assert q2.shape == (batch2, output_dim)
    ref_q2 = ref_forward_quantized(x2, kernel_params, output_dim)
    assert jnp.allclose(q2, ref_q2, atol=2e-2, rtol=2e-2)

    print("KERNEL_OK")
</pallas_src>

<mosaic_0001>
module attributes {stable_mosaic.version = 11 : i64} {
  func.func @dqn_kernel(%arg0: i32, %arg1: memref<8x4xf32, #tpu.memory_space<vmem>>, %arg2: memref<4x128xf32, #tpu.memory_space<vmem>>, %arg3: memref<1x128xf32, #tpu.memory_space<vmem>>, %arg4: memref<128x128xbf16, #tpu.memory_space<vmem>>, %arg5: memref<1x128xf32, #tpu.memory_space<vmem>>, %arg6: memref<128x128xbf16, #tpu.memory_space<vmem>>, %arg7: memref<1x128xf32, #tpu.memory_space<vmem>>, %arg8: memref<8x128xbf16, #tpu.memory_space<vmem>>) attributes {dimension_semantics = [#tpu.dimension_semantics<parallel>], iteration_bounds = array<i64: 1>, scalar_prefetch = 0 : i64, scratch_operands = 0 : i64, tpu.core_type = #tpu.core_type<tc>, window_params = [{transform_indices = @transform_0, window_bounds = array<i64: 8, 4>}, {pipeline_mode = #tpu.pipeline_mode<synchronous>, transform_indices = @transform_1, window_bounds = array<i64: 4, 128>}, {pipeline_mode = #tpu.pipeline_mode<synchronous>, transform_indices = @transform_2, window_bounds = array<i64: 1, 128>}, {pipeline_mode = #tpu.pipeline_mode<synchronous>, transform_indices = @transform_3, window_bounds = array<i64: 128, 128>}, {pipeline_mode = #tpu.pipeline_mode<synchronous>, transform_indices = @transform_4, window_bounds = array<i64: 1, 128>}, {pipeline_mode = #tpu.pipeline_mode<synchronous>, transform_indices = @transform_5, window_bounds = array<i64: 128, 128>}, {pipeline_mode = #tpu.pipeline_mode<synchronous>, transform_indices = @transform_6, window_bounds = array<i64: 1, 128>}, {transform_indices = @transform_7, window_bounds = array<i64: 8, 128>}]} {
    %c0 = arith.constant 0 : index
    %c0_0 = arith.constant 0 : index
    %0 = vector.load %arg1[%c0, %c0_0] : memref<8x4xf32, #tpu.memory_space<vmem>>, vector<8x4xf32>
    %c0_1 = arith.constant 0 : index
    %c0_2 = arith.constant 0 : index
    %1 = vector.load %arg2[%c0_1, %c0_2] : memref<4x128xf32, #tpu.memory_space<vmem>>, vector<4x128xf32>
    %cst = arith.constant dense<0.000000e+00> : vector<8x128xf32>
    %2 = tpu.matmul %0, %1, %cst {dimension_numbers = #tpu.dot_dimension_numbers<[1], [0], [0], [1], [0, 0, 1, 1], [], []>} : vector<8x4xf32>, vector<4x128xf32>, vector<8x128xf32> -> vector<8x128xf32>
    %c0_3 = arith.constant 0 : index
    %c0_4 = arith.constant 0 : index
    %3 = vector.load %arg3[%c0_3, %c0_4] : memref<1x128xf32, #tpu.memory_space<vmem>>, vector<1x128xf32>
    %4 = vector.broadcast %3 : vector<1x128xf32> to vector<8x128xf32>
    %5 = arith.addf %2, %4 : vector<8x128xf32>
    %cst_5 = arith.constant 0.000000e+00 : f32
    %6 = vector.broadcast %cst_5 : f32 to vector<8x128xf32>
    %7 = arith.maximumf %5, %6 : vector<8x128xf32>
    %8 = arith.truncf %7 : vector<8x128xf32> to vector<8x128xbf16>
    %c0_6 = arith.constant 0 : index
    %c0_7 = arith.constant 0 : index
    %9 = vector.load %arg4[%c0_6, %c0_7] : memref<128x128xbf16, #tpu.memory_space<vmem>>, vector<128x128xbf16>
    %cst_8 = arith.constant dense<0.000000e+00> : vector<8x128xf32>
    %10 = tpu.matmul %8, %9, %cst_8 {dimension_numbers = #tpu.dot_dimension_numbers<[1], [0], [0], [1], [0, 0, 1, 1], [], []>} : vector<8x128xbf16>, vector<128x128xbf16>, vector<8x128xf32> -> vector<8x128xf32>
    %c0_9 = arith.constant 0 : index
    %c0_10 = arith.constant 0 : index
    %11 = vector.load %arg5[%c0_9, %c0_10] : memref<1x128xf32, #tpu.memory_space<vmem>>, vector<1x128xf32>
    %12 = vector.broadcast %11 : vector<1x128xf32> to vector<8x128xf32>
    %13 = arith.addf %10, %12 : vector<8x128xf32>
    %cst_11 = arith.constant 0.000000e+00 : f32
    %14 = vector.broadcast %cst_11 : f32 to vector<8x128xf32>
    %15 = arith.maximumf %13, %14 : vector<8x128xf32>
    %16 = arith.truncf %15 : vector<8x128xf32> to vector<8x128xbf16>
    %c0_12 = arith.constant 0 : index
    %c0_13 = arith.constant 0 : index
    %17 = vector.load %arg6[%c0_12, %c0_13] : memref<128x128xbf16, #tpu.memory_space<vmem>>, vector<128x128xbf16>
    %cst_14 = arith.constant dense<0.000000e+00> : vector<8x128xf32>
    %18 = tpu.matmul %16, %17, %cst_14 {dimension_numbers = #tpu.dot_dimension_numbers<[1], [0], [0], [1], [0, 0, 1, 1], [], []>} : vector<8x128xbf16>, vector<128x128xbf16>, vector<8x128xf32> -> vector<8x128xf32>
    %c0_15 = arith.constant 0 : index
    %c0_16 = arith.constant 0 : index
    %19 = vector.load %arg7[%c0_15, %c0_16] : memref<1x128xf32, #tpu.memory_space<vmem>>, vector<1x128xf32>
    %20 = vector.broadcast %19 : vector<1x128xf32> to vector<8x128xf32>
    %21 = arith.addf %18, %20 : vector<8x128xf32>
    %22 = arith.truncf %21 : vector<8x128xf32> to vector<8x128xbf16>
    %c0_17 = arith.constant 0 : index
    %c0_18 = arith.constant 0 : index
    %23 = vector.load %arg8[%c0_17, %c0_18] : memref<8x128xbf16, #tpu.memory_space<vmem>>, vector<8x128xbf16>
    tpu.vector_store %arg8[%c0_17, %c0_18], %22 {strides = array<i32>} : memref<8x128xbf16, #tpu.memory_space<vmem>>, vector<8x128xbf16>,
    return
  }
  func.func @transform_0(%arg0: i32) -> (i32, i32) {
    %c0_i32 = arith.constant 0 : i32
    %c0_i32_0 = arith.constant 0 : i32
    return %arg0, %c0_i32 : i32, i32
  }
  func.func @transform_1(%arg0: i32) -> (i32, i32) {
    %c0_i32 = arith.constant 0 : i32
    %c0_i32_0 = arith.constant 0 : i32
    %c0_i32_1 = arith.constant 0 : i32
    return %c0_i32, %c0_i32_0 : i32, i32
  }
  func.func @transform_2(%arg0: i32) -> (i32, i32) {
    %c0_i32 = arith.constant 0 : i32
    %c0_i32_0 = arith.constant 0 : i32
    %c0_i32_1 = arith.constant 0 : i32
    return %c0_i32, %c0_i32_0 : i32, i32
  }
  func.func @transform_3(%arg0: i32) -> (i32, i32) {
    %c0_i32 = arith.constant 0 : i32
    %c0_i32_0 = arith.constant 0 : i32
    %c0_i32_1 = arith.constant 0 : i32
    return %c0_i32, %c0_i32_0 : i32, i32
  }
  func.func @transform_4(%arg0: i32) -> (i32, i32) {
    %c0_i32 = arith.constant 0 : i32
    %c0_i32_0 = arith.constant 0 : i32
    %c0_i32_1 = arith.constant 0 : i32
    return %c0_i32, %c0_i32_0 : i32, i32
  }
  func.func @transform_5(%arg0: i32) -> (i32, i32) {
    %c0_i32 = arith.constant 0 : i32
    %c0_i32_0 = arith.constant 0 : i32
    %c0_i32_1 = arith.constant 0 : i32
    return %c0_i32, %c0_i32_0 : i32, i32
  }
  func.func @transform_6(%arg0: i32) -> (i32, i32) {
    %c0_i32 = arith.constant 0 : i32
    %c0_i32_0 = arith.constant 0 : i32
    %c0_i32_1 = arith.constant 0 : i32
    return %c0_i32, %c0_i32_0 : i32, i32
  }
  func.func @transform_7(%arg0: i32) -> (i32, i32) {
    %c0_i32 = arith.constant 0 : i32
    %c0_i32_0 = arith.constant 0 : i32
    return %arg0, %c0_i32 : i32, i32
  }
}

</mosaic_0001>

<llo_original>
// kernel: tpu_custom_call.1
$region0: #{tpu_custom_call.1}
  #allocation0 [shape = 'u32[]', space=smem, size = 0x4, offset = 0x4, fixed_abs, tag = 'smem constant byte address 0x4 - core index']
  #allocation1 [shape = 'u32[144,128]{1,0:T(1,128)}', space=vmem, size = 0x12000, scoped, tag = 'internal scratch']
  %s0 = inlined_call_operand.vmem [shape: f32[8,4], index: 0, kind: input, shape index: {}]
  %s1 = inlined_call_operand.vmem [shape: f32[4,128], index: 1, kind: input, shape index: {}]
  %s2 = inlined_call_operand.vmem [shape: f32[1,128], index: 2, kind: input, shape index: {}]
  %s3 = inlined_call_operand.hbm [shape: bf16[128,128], index: 3, kind: input, shape index: {}]
  %s4 = inlined_call_operand.vmem [shape: f32[1,128], index: 4, kind: input, shape index: {}]
  %s5 = inlined_call_operand.hbm [shape: bf16[128,128], index: 5, kind: input, shape index: {}]
  %s6 = inlined_call_operand.vmem [shape: f32[1,128], index: 6, kind: input, shape index: {}]
  %s7 = inlined_call_operand.hbm [shape: bf16[8,128], index: 7, kind: output, shape index: {}]
  %s8 = sld [smem:[#allocation0]]
  $region46: #{tpu_custom_call.1} parent=0
    _
  %s10 = ssub.s32 1, %s8
  %s11 = scalar_select 0, %s10, %s8
  $region1: #{tpu_custom_call.1} parent=0
    #allocation2 [shape = 'u8[32768]{0}', space=vmem, size = 0x8000, scoped, tag = 'input window, operand 3, single buffered']
    #allocation3 [shape = 's32[1]{0}', space=sflag, size = 0x4, scoped, tag = 'scoped memory for tpu_custom_call.1']
    #allocation4 [shape = 's32[1]{0}', space=sflag, size = 0x4, scoped, tag = 'scoped memory for tpu_custom_call.1']
    #allocation5 [shape = 'u8[32768]{0}', space=vmem, size = 0x8000, scoped, tag = 'input window, operand 5, single buffered']
    #allocation6 [shape = 's32[1]{0}', space=sflag, size = 0x4, scoped, tag = 'scoped memory for tpu_custom_call.1']
    #allocation7 [shape = 'u8[2048]{0}', space=vmem, size = 0x800, scoped, tag = 'output window, operand 0, single buffered']
    %12 = vsyncpa [#allocation3], 0
    %13 = vsyncpa [#allocation6], 0
    %14 = vsyncpa [#allocation4], 0
    // Predicated region
    $region2: #{tpu_custom_call.1} parent=1 // pred_check
      _
    $region3: #{tpu_custom_call.1} parent=1 // pred_check_branch
      %16 = sbr.rel (0) target = $region5
    $region4: #{tpu_custom_call.1} parent=1 // pred_region
      _
    $region5: #{tpu_custom_call.1} parent=1 // pred_fallthru
      _
    // Predicated region
    $region6: #{tpu_custom_call.1} parent=1 // pred_check
      _
    $region7: #{tpu_custom_call.1} parent=1 // pred_check_branch
      %18 = sbr.rel (0) target = $region9
    $region8: #{tpu_custom_call.1} parent=1 // pred_region
      _
    $region9: #{tpu_custom_call.1} parent=1 // pred_fallthru
      _
    // Predicated region
    $region10: #{tpu_custom_call.1} parent=1 // pred_check
      _
    $region11: #{tpu_custom_call.1} parent=1 // pred_check_branch
      %20 = sbr.rel (0) target = $region13
    $region12: #{tpu_custom_call.1} parent=1 // pred_region
      _
    $region13: #{tpu_custom_call.1} parent=1 // pred_fallthru
      _
    // Predicated region
    $region14: #{tpu_custom_call.1} parent=1 // pred_check
      _
    $region15: #{tpu_custom_call.1} parent=1 // pred_check_branch
      %22 = sbr.rel (0) target = $region17
    $region16: #{tpu_custom_call.1} parent=1 // pred_region
      %s24 = ssub.s32 1024, 1024
      %25 = vsyncadd [#allocation3], %s24
      %s26 = sshll.u32 [#allocation2], 4
      %s27 = int_to_ptr.vmem [resolvable:$true] %s26
      %32 = dma.hbm_to_vmem [thread:$0]  %s3, 1024, %s27, [#allocation3], 64, 64, 4
    $region17: #{tpu_custom_call.1} parent=1 // pred_fallthru
      _
    // Predicated region
    $region18: #{tpu_custom_call.1} parent=1 // pred_check
      _
    $region19: #{tpu_custom_call.1} parent=1 // pred_check_branch
      %34 = sbr.rel (0) target = $region21
    $region20: #{tpu_custom_call.1} parent=1 // pred_region
      _
    $region21: #{tpu_custom_call.1} parent=1 // pred_fallthru
      _
    // Predicated region
    $region22: #{tpu_custom_call.1} parent=1 // pred_check
      _
    $region23: #{tpu_custom_call.1} parent=1 // pred_check_branch
      %36 = sbr.rel (0) target = $region25
    $region24: #{tpu_custom_call.1} parent=1 // pred_region
      %s38 = ssub.s32 1024, 1024
      %39 = vsyncadd [#allocation6], %s38
      %s40 = sshll.u32 [#allocation5], 4
      %s41 = int_to_ptr.vmem [resolvable:$true] %s40
      %46 = dma.hbm_to_vmem [thread:$0]  %s5, 1024, %s41, [#allocation6], 64, 64, 4
    $region25: #{tpu_custom_call.1} parent=1 // pred_fallthru
      _
    // Predicated region
    $region26: #{tpu_custom_call.1} parent=1 // pred_check
      _
    $region27: #{tpu_custom_call.1} parent=1 // pred_check_branch
      %48 = sbr.rel (0) target = $region29
    $region28: #{tpu_custom_call.1} parent=1 // pred_region
      _
    $region29: #{tpu_custom_call.1} parent=1 // pred_fallthru
      _
    // Predicated region
    $region30: #{tpu_custom_call.1} parent=1 // pred_check
      _
    $region31: #{tpu_custom_call.1} parent=1 // pred_check_branch
      %50 = sbr.rel (0) target = $region33
    $region32: #{tpu_custom_call.1} parent=1 // pred_region
      %51 = dma.done [#allocation3], 1024
    $region33: #{tpu_custom_call.1} parent=1 // pred_fallthru
      _
    // Predicated region
    $region34: #{tpu_custom_call.1} parent=1 // pred_check
      _
    $region35: #{tpu_custom_call.1} parent=1 // pred_check_branch
      %53 = sbr.rel (0) target = $region37
    $region36: #{tpu_custom_call.1} parent=1 // pred_region
      %54 = dma.done [#allocation6], 1024
    $region37: #{tpu_custom_call.1} parent=1 // pred_fallthru
      _
    %v56 = vld [vmem:[%s0] sm:$0xff]
    %v57 = vld [vmem:[%s1] sm:$0xf]
    %v58 = vld [vmem:[%s2] sm:$0x1]
    %v60 = vlaneseq
    %v61 = vshrl.u32 %v60, 7
    %v62 = vsub.s32 0, %v61
    %v63 = vrot.slane %v58, %v62
    %vm65 = vcmask 31744
    %v67 = vsel %vm65, %v56, 0
    %vm69 = vcmask 1043456
    %v71 = vsel %vm69, %v57, 0
    %73 = vmatprep.subr.mxu0 0.0
    %74 = vmatpush1.msra.mxu0 0.0
    %75 = vmatprep.subr.mxu0 0.0
    %76 = vmatpush1.msra.mxu0 0.0
    %77 = vmatprep.subr.mxu0 0.0
    %78 = vmatpush1.msra.mxu0 0.0
    %79 = vmatprep.subr.mxu0 0.0
    %80 = vmatpush1.msra.mxu0 0.0
    %81 = vmatprep.subr.mxu0 0.0
    %82 = vmatpush1.msra.mxu0 0.0
    %83 = vmatprep.subr.mxu0 0.0
    %84 = vmatpush1.msra.mxu0 0.0
    %85 = vmatprep.subr.mxu0 0.0
    %86 = vmatpush1.msra.mxu0 0.0
    %87 = vmatprep.subr.mxu0 0.0
    %88 = vmatpush1.msra.mxu0 0.0
    %89 = vmatprep.subr.mxu0 0.0
    %90 = vmatpush1.msra.mxu0 0.0
    %91 = vmatprep.subr.mxu0 0.0
    %92 = vmatpush1.msra.mxu0 0.0
    %93 = vmatprep.subr.mxu0 0.0
    %94 = vmatpush1.msra.mxu0 0.0
    %95 = vmatprep.subr.mxu0 0.0
    %96 = vmatpush1.msra.mxu0 0.0
    %97 = vmatprep.subr.mxu0 0.0
    %98 = vmatpush1.msra.mxu0 0.0
    %99 = vmatprep.subr.mxu0 0.0
    %100 = vmatpush1.msra.mxu0 0.0
    %101 = vmatprep.subr.mxu0 0.0
    %102 = vmatpush1.msra.mxu0 0.0
    %103 = vmatprep.subr.mxu0 0.0
    %104 = vmatpush1.msra.mxu0 %v71
    %105 = vmatprep.subr.mxu0 0.0
    %106 = vmatpush2.msra.mxu0 0.0
    %107 = vmatprep.subr.mxu0 0.0
    %108 = vmatpush2.msra.mxu0 0.0
    %109 = vmatprep.subr.mxu0 0.0
    %110 = vmatpush2.msra.mxu0 0.0
    %111 = vmatprep.subr.mxu0 0.0
    %112 = vmatpush2.msra.mxu0 0.0
    %113 = vmatprep.subr.mxu0 0.0
    %114 = vmatpush2.msra.mxu0 0.0
    %115 = vmatprep.subr.mxu0 0.0
    %116 = vmatpush2.msra.mxu0 0.0
    %117 = vmatprep.subr.mxu0 0.0
    %118 = vmatpush2.msra.mxu0 0.0
    %119 = vmatprep.subr.mxu0 0.0
    %120 = vmatpush2.msra.mxu0 0.0
    %121 = vmatprep.subr.mxu0 0.0
    %122 = vmatpush2.msra.mxu0 0.0
    %123 = vmatprep.subr.mxu0 0.0
    %124 = vmatpush2.msra.mxu0 0.0
    %125 = vmatprep.subr.mxu0 0.0
    %126 = vmatpush2.msra.mxu0 0.0
    %127 = vmatprep.subr.mxu0 0.0
    %128 = vmatpush2.msra.mxu0 0.0
    %129 = vmatprep.subr.mxu0 0.0
    %130 = vmatpush2.msra.mxu0 0.0
    %131 = vmatprep.subr.mxu0 0.0
    %132 = vmatpush2.msra.mxu0 0.0
    %133 = vmatprep.subr.mxu0 0.0
    %134 = vmatpush2.msra.mxu0 0.0
    %135 = vmatprep.subr.mxu0 0.0
    %136 = vmatpush2.msra.mxu0 0.0
    %137 = vmatprep.mubr.f32.mxu0 0.0
    %138 = vmatmul.mubr.f32.gmra.mxu0 %v67
    %v139 = vpop.f32.mrf.mxu0
    %v140 = vadd.f32 %v63, %v139
    %v141 = vpop.f32.mrf.mxu0
    %142 = vdwg.mxu0
    %v143 = vmax.f32 %v140, 0.0
    %v144 = vpack.c.bf16 %v143, %v143
    %v145 = vld [vmem:[#allocation2] sm:$0xf]
    %v146 = vld [vmem:[#allocation2 + $0x4] sm:$0xf]
    %v147 = vld [vmem:[#allocation2 + $0x8] sm:$0xf]
    %v148 = vld [vmem:[#allocation2 + $0xc] sm:$0xf]
    %v149 = vld [vmem:[#allocation2 + $0x10] sm:$0xf]
    %v150 = vld [vmem:[#allocation2 + $0x14] sm:$0xf]
    %v151 = vld [vmem:[#allocation2 + $0x18] sm:$0xf]
    %v152 = vld [vmem:[#allocation2 + $0x1c] sm:$0xf]
    %v153 = vld [vmem:[#allocation2 + $0x20] sm:$0xf]
    %v154 = vld [vmem:[#allocation2 + $0x24] sm:$0xf]
    %v155 = vld [vmem:[#allocation2 + $0x28] sm:$0xf]
    %v156 = vld [vmem:[#allocation2 + $0x2c] sm:$0xf]
    %v157 = vld [vmem:[#allocation2 + $0x30] sm:$0xf]
    %v158 = vld [vmem:[#allocation2 + $0x34] sm:$0xf]
    %v159 = vld [vmem:[#allocation2 + $0x38] sm:$0xf]
    %v160 = vld [vmem:[#allocation2 + $0x3c] sm:$0xf]
    %v161 = vld [vmem:[%s4] sm:$0x1]
    %v163 = vlaneseq
    %v164 = vshrl.u32 %v163, 7
    %v165 = vsub.s32 0, %v164
    %v166 = vrot.slane %v161, %v165
    %v184 = vunpack.c.l.b16 %v145
    %v185 = vunpack.c.l.b16 %v146
    %v186 = vunpack.c.l.b16 %v147
    %v187 = vunpack.c.l.b16 %v148
    %v188 = vunpack.c.l.b16 %v149
    %v189 = vunpack.c.l.b16 %v150
    %v190 = vunpack.c.l.b16 %v151
    %v191 = vunpack.c.l.b16 %v152
    %v192 = vunpack.c.l.b16 %v153
    %v193 = vunpack.c.l.b16 %v154
    %v194 = vunpack.c.l.b16 %v155
    %v195 = vunpack.c.l.b16 %v156
    %v196 = vunpack.c.l.b16 %v157
    %v197 = vunpack.c.l.b16 %v158
    %v198 = vunpack.c.l.b16 %v159
    %v199 = vunpack.c.l.b16 %v160
    %v200 = vpack.c.b16 %v185, %v184
    %v201 = vpack.c.b16 %v187, %v186
    %v202 = vpack.c.b16 %v189, %v188
    %v203 = vpack.c.b16 %v191, %v190
    %v204 = vpack.c.b16 %v193, %v192
    %v205 = vpack.c.b16 %v195, %v194
    %v206 = vpack.c.b16 %v197, %v196
    %v207 = vpack.c.b16 %v199, %v198
    %216 = vmatprep.subr.bf16.mxu0 0
    %217 = vmatpush1.bf16.msra.mxu0 %v207
    %218 = vmatprep.subr.bf16.mxu0 0
    %219 = vmatpush1.bf16.msra.mxu0 %v206
    %220 = vmatprep.subr.bf16.mxu0 0
    %221 = vmatpush1.bf16.msra.mxu0 %v205
    %222 = vmatprep.subr.bf16.mxu0 0
    %223 = vmatpush1.bf16.msra.mxu0 %v204
    %224 = vmatprep.subr.bf16.mxu0 0
    %225 = vmatpush1.bf16.msra.mxu0 %v203
    %226 = vmatprep.subr.bf16.mxu0 0
    %227 = vmatpush1.bf16.msra.mxu0 %v202
    %228 = vmatprep.subr.bf16.mxu0 0
    %229 = vmatpush1.bf16.msra.mxu0 %v201
    %230 = vmatprep.subr.bf16.mxu0 0
    %231 = vmatpush1.bf16.msra.mxu0 %v200
    %232 = vmatprep.subr.bf16.mxu0 0
    %233 = vmatpush2.bf16.msra.mxu0 0
    %234 = vmatprep.subr.bf16.mxu0 0
    %235 = vmatpush2.bf16.msra.mxu0 0
    %236 = vmatprep.subr.bf16.mxu0 0
    %237 = vmatpush2.bf16.msra.mxu0 0
    %238 = vmatprep.subr.bf16.mxu0 0
    %239 = vmatpush2.bf16.msra.mxu0 0
    %240 = vmatprep.subr.bf16.mxu0 0
    %241 = vmatpush2.bf16.msra.mxu0 0
    %242 = vmatprep.subr.bf16.mxu0 0
    %243 = vmatpush2.bf16.msra.mxu0 0
    %244 = vmatprep.subr.bf16.mxu0 0
    %245 = vmatpush2.bf16.msra.mxu0 0
    %246 = vmatprep.subr.bf16.mxu0 0
    %247 = vmatpush2.bf16.msra.mxu0 0
    %248 = vmatprep.mubr.bf16.mxu0 0
    %249 = vmatmul.mubr.bf16.gmra.mxu0 %v144
    %v250 = vpop.f32.mrf.mxu0
    %v251 = vadd.f32 %v166, %v250
    %v252 = vpop.f32.mrf.mxu0
    %v253 = vpop.f32.mrf.mxu0
    %v254 = vpop.f32.mrf.mxu0
    %255 = vdwg.mxu0
    %v256 = vmax.f32 %v251, 0.0
    %v257 = vpack.c.bf16 %v256, %v256
    %v258 = vld [vmem:[#allocation5] sm:$0xf]
    %v259 = vld [vmem:[#allocation5 + $0x4] sm:$0xf]
    %v260 = vld [vmem:[#allocation5 + $0x8] sm:$0xf]
    %v261 = vld [vmem:[#allocation5 + $0xc] sm:$0xf]
    %v262 = vld [vmem:[#allocation5 + $0x10] sm:$0xf]
    %v263 = vld [vmem:[#allocation5 + $0x14] sm:$0xf]
    %v264 = vld [vmem:[#allocation5 + $0x18] sm:$0xf]
    %v265 = vld [vmem:[#allocation5 + $0x1c] sm:$0xf]
    %v266 = vld [vmem:[#allocation5 + $0x20] sm:$0xf]
    %v267 = vld [vmem:[#allocation5 + $0x24] sm:$0xf]
    %v268 = vld [vmem:[#allocation5 + $0x28] sm:$0xf]
    %v269 = vld [vmem:[#allocation5 + $0x2c] sm:$0xf]
    %v270 = vld [vmem:[#allocation5 + $0x30] sm:$0xf]
    %v271 = vld [vmem:[#allocation5 + $0x34] sm:$0xf]
    %v272 = vld [vmem:[#allocation5 + $0x38] sm:$0xf]
    %v273 = vld [vmem:[#allocation5 + $0x3c] sm:$0xf]
    %v274 = vld [vmem:[%s6] sm:$0x1]
    %v276 = vlaneseq
    %v277 = vshrl.u32 %v276, 7
    %v278 = vsub.s32 0, %v277
    %v279 = vrot.slane %v274, %v278
    %v297 = vunpack.c.l.b16 %v258
    %v298 = vunpack.c.l.b16 %v259
    %v299 = vunpack.c.l.b16 %v260
    %v300 = vunpack.c.l.b16 %v261
    %v301 = vunpack.c.l.b16 %v262
    %v302 = vunpack.c.l.b16 %v263
    %v303 = vunpack.c.l.b16 %v264
    %v304 = vunpack.c.l.b16 %v265
    %v305 = vunpack.c.l.b16 %v266
    %v306 = vunpack.c.l.b16 %v267
    %v307 = vunpack.c.l.b16 %v268
    %v308 = vunpack.c.l.b16 %v269
    %v309 = vunpack.c.l.b16 %v270
    %v310 = vunpack.c.l.b16 %v271
    %v311 = vunpack.c.l.b16 %v272
    %v312 = vunpack.c.l.b16 %v273
    %v313 = vpack.c.b16 %v298, %v297
    %v314 = vpack.c.b16 %v300, %v299
    %v315 = vpack.c.b16 %v302, %v301
    %v316 = vpack.c.b16 %v304, %v303
    %v317 = vpack.c.b16 %v306, %v305
    %v318 = vpack.c.b16 %v308, %v307
    %v319 = vpack.c.b16 %v310, %v309
    %v320 = vpack.c.b16 %v312, %v311
    %329 = vmatprep.subr.bf16.mxu0 0
    %330 = vmatpush1.bf16.msra.mxu0 %v320
    %331 = vmatprep.subr.bf16.mxu0 0
    %332 = vmatpush1.bf16.msra.mxu0 %v319
    %333 = vmatprep.subr.bf16.mxu0 0
    %334 = vmatpush1.bf16.msra.mxu0 %v318
    %335 = vmatprep.subr.bf16.mxu0 0
    %336 = vmatpush1.bf16.msra.mxu0 %v317
    %337 = vmatprep.subr.bf16.mxu0 0
    %338 = vmatpush1.bf16.msra.mxu0 %v316
    %339 = vmatprep.subr.bf16.mxu0 0
    %340 = vmatpush1.bf16.msra.mxu0 %v315
    %341 = vmatprep.subr.bf16.mxu0 0
    %342 = vmatpush1.bf16.msra.mxu0 %v314
    %343 = vmatprep.subr.bf16.mxu0 0
    %344 = vmatpush1.bf16.msra.mxu0 %v313
    %345 = vmatprep.subr.bf16.mxu0 0
    %346 = vmatpush2.bf16.msra.mxu0 0
    %347 = vmatprep.subr.bf16.mxu0 0
    %348 = vmatpush2.bf16.msra.mxu0 0
    %349 = vmatprep.subr.bf16.mxu0 0
    %350 = vmatpush2.bf16.msra.mxu0 0
    %351 = vmatprep.subr.bf16.mxu0 0
    %352 = vmatpush2.bf16.msra.mxu0 0
    %353 = vmatprep.subr.bf16.mxu0 0
    %354 = vmatpush2.bf16.msra.mxu0 0
    %355 = vmatprep.subr.bf16.mxu0 0
    %356 = vmatpush2.bf16.msra.mxu0 0
    %357 = vmatprep.subr.bf16.mxu0 0
    %358 = vmatpush2.bf16.msra.mxu0 0
    %359 = vmatprep.subr.bf16.mxu0 0
    %360 = vmatpush2.bf16.msra.mxu0 0
    %361 = vmatprep.mubr.bf16.mxu0 0
    %362 = vmatmul.mubr.bf16.gmra.mxu0 %v257
    %v363 = vpop.f32.mrf.mxu0
    %v364 = vadd.f32 %v279, %v363
    %v365 = vpop.f32.mrf.mxu0
    %v366 = vpop.f32.mrf.mxu0
    %v367 = vpop.f32.mrf.mxu0
    %368 = vdwg.mxu0
    %v369 = vpack.c.bf16 %v364, %v364
    %370 = vst [vmem:[#allocation7] sm:$0xf] %v369
    // Predicated region
    $region38: #{tpu_custom_call.1} parent=1 // pred_check
      _
    $region39: #{tpu_custom_call.1} parent=1 // pred_check_branch
      %372 = sbr.rel (0) target = $region41
    $region40: #{tpu_custom_call.1} parent=1 // pred_region
      %s374 = ssub.s32 64, 64
      %375 = vsyncadd [#allocation4], %s374
      %s377 = sshll.u32 [#allocation7], 4
      %s378 = int_to_ptr.vmem [resolvable:$true] %s377
      %380 = dma.vmem_to_hbm [thread:$0]  %s378, 64, %s7, [#allocation4]
    $region41: #{tpu_custom_call.1} parent=1 // pred_fallthru
      _
    // Predicated region
    $region42: #{tpu_custom_call.1} parent=1 // pred_check
      _
    $region43: #{tpu_custom_call.1} parent=1 // pred_check_branch
      %382 = sbr.rel (0) target = $region45
    $region44: #{tpu_custom_call.1} parent=1 // pred_region
      %383 = dma.done [#allocation4], 64
    $region45: #{tpu_custom_call.1} parent=1 // pred_fallthru
      _
    %384 = vsyncpa [#allocation3], 1
    %385 = vsyncpa [#allocation6], 1
    %386 = vsyncpa [#allocation4], 1

</llo_original>
